<compile_context>
chip_gen: v5e
topology: v5e:2x2
jax: 0.10.0
libtpu: 0.0.40
codegen_flags: <defaults>
</compile_context>

<pallas_src>
import functools
import math

import jax
import jax.numpy as jnp
from jax.experimental import pallas as pl
from jax.experimental.pallas import tpu as pltpu

_SMOOTH = 1e-5
_ROW_TILE = 8              # sublane-aligned row block (f32 vreg height)
_NEUTRAL_LOGIT = -100.0    # softplus(-100) ~ 0, sigmoid(-100) ~ 0 -> neutral pad


def _round_up(x, m):
    return ((x + m - 1) // m) * m


def _default_vmem_limit():
    """Generation-aware scoped-VMEM limit (conservative if query fails)."""
    cap = None
    try:
        info = pltpu.get_tpu_info()
        cap = getattr(info, "vmem_capacity_bytes", None)
    except Exception:
        cap = None
    if not cap:
        cap = 64 * 1024 * 1024          # assume v7x-sized VMEM when unknown
    return int(min(cap * 3 // 4, 100 * 1024 * 1024))


def _pick_tile_f(fr, itemsize_sum, vmem_limit):
    """Feature-tile width: 2 inputs x 2 pipeline buffers x (8, tile_f) plus the
    f32 accumulators / output blocks, kept under half the scoped-VMEM limit."""
    fixed = 3 * _ROW_TILE * 512 * 4 * 3            # scratch + buffered out blocks
    budget = max(vmem_limit // 2 - fixed, 512 * 1024)
    per_lane = 2 * _ROW_TILE * itemsize_sum        # both inputs, double-buffered
    tf = (budget // per_lane) // 512 * 512
    tf = max(512, min(tf, 16 * 1024))
    tf = min(tf, _round_up(fr, 512))
    return max(128, tf)


def _logcosh_bd_kernel(pred_ref, true_ref, bce_out, inter_out, denom_out,
                       acc_bce, acc_inter, acc_denom, *, acc_w, n_chunks):
    k = pl.program_id(2)

    @pl.when(k == 0)
    def _init():
        acc_bce[...] = jnp.zeros_like(acc_bce)
        acc_inter[...] = jnp.zeros_like(acc_inter)
        acc_denom[...] = jnp.zeros_like(acc_denom)

    def chunk(c):
        lo = c * acc_w                               # static, lane-aligned slice
        x = pred_ref[:, lo:lo + acc_w].astype(jnp.float32)
        y = true_ref[:, lo:lo + acc_w].astype(jnp.float32)
        e = jnp.exp(-jnp.abs(x))                     # one exp, reused
        inv = pl.reciprocal(1.0 + e, approx=True)    # EUP vrcp (hot loop only)
        s = jnp.where(x >= 0.0, inv, e * inv)        # sigmoid(x)
        bce = jnp.maximum(x, 0.0) - x * y + jnp.log1p(e)
        return bce, s * y, s + y

    # Fold the whole tile into (8, acc_w) register slabs with chained VPU adds.
    bce_s, inter_s, denom_s = chunk(0)
    for c in range(1, n_chunks):
        b, i, d = chunk(c)
        bce_s += b
        inter_s += i
        denom_s += d

    # Single read-modify-write per accumulator per grid step.
    acc_bce[...] += bce_s
    acc_inter[...] += inter_s
    acc_denom[...] += denom_s

    @pl.when(k == pl.num_programs(2) - 1)
    def _finalize():
        bce_out[0] = acc_bce[...]
        inter_out[0] = acc_inter[...]
        denom_out[0] = acc_denom[...]


def logcosh_bd_loss(y_pred, y_true, *, tile_f=None, num_splits=None,
                    vmem_limit_bytes=None):
    """Equivalent of LogCoshBDLoss73.forward(y_pred, y_true) -> scalar."""
    assert y_pred.shape == y_true.shape
    n = y_pred.shape[0]
    f = 1
    for d in y_pred.shape[1:]:
        f *= int(d)

    # Sublane packing: rows-per-sample so that n * g is a multiple of 8.
    g = _ROW_TILE // math.gcd(n, _ROW_TILE)
    r = n * g
    fr = -(-f // g)                                  # features per row (ceil)

    itemsize_sum = (jnp.dtype(y_pred.dtype).itemsize
                    + jnp.dtype(y_true.dtype).itemsize)

    if vmem_limit_bytes is None:
        vmem_limit_bytes = _default_vmem_limit()

    if tile_f is None:
        tile_f = _pick_tile_f(fr, itemsize_sum, vmem_limit_bytes)
    else:
        tile_f = max(128, _round_up(int(tile_f), 128))

    acc_w = 512 if tile_f % 512 == 0 else 128
    n_chunks = tile_f // acc_w

    num_k_total = -(-fr // tile_f)
    if num_splits is None:
        num_splits = 2 if num_k_total >= 2 else 1    # 2-TC split on v7x, cheap elsewhere
    num_splits = max(1, int(num_splits))
    num_k_split = -(-num_k_total // num_splits)
    fr_pad = num_splits * num_k_split * tile_f
    num_rb = r // _ROW_TILE

    # Flatten + neutral padding (no per-tile masking in the kernel).
    pred2 = jnp.reshape(y_pred, (n, f))
    true2 = jnp.reshape(y_true, (n, f))
    pad = g * fr_pad - f
    if pad > 0:
        pred2 = jnp.pad(pred2, ((0, 0), (0, pad)), constant_values=_NEUTRAL_LOGIT)
        true2 = jnp.pad(true2, ((0, 0), (0, pad)), constant_values=0)
    pred2 = jnp.reshape(pred2, (r, fr_pad))
    true2 = jnp.reshape(true2, (r, fr_pad))

    kernel = functools.partial(_logcosh_bd_kernel, acc_w=acc_w, n_chunks=n_chunks)

    in_map = lambda s, rb, k, nks=num_k_split: (rb, s * nks + k)
    out_map = lambda s, rb, k: (s, rb, 0)
    out_struct = jax.ShapeDtypeStruct((num_splits, r, acc_w), jnp.float32)

    cost = pl.CostEstimate(
        flops=14 * r * fr_pad,
        transcendentals=3 * r * fr_pad,
        bytes_accessed=r * fr_pad * itemsize_sum + 3 * num_splits * r * acc_w * 4,
    )

    bce_p, inter_p, denom_p = pl.pallas_call(
        kernel,
        out_shape=(out_struct, out_struct, out_struct),
        grid_spec=pltpu.PrefetchScalarGridSpec(
            num_scalar_prefetch=0,
            grid=(num_splits, num_rb, num_k_split),
            in_specs=[
                pl.BlockSpec((_ROW_TILE, tile_f), in_map),
                pl.BlockSpec((_ROW_TILE, tile_f), in_map),
            ],
            out_specs=[
                pl.BlockSpec((1, _ROW_TILE, acc_w), out_map),
                pl.BlockSpec((1, _ROW_TILE, acc_w), out_map),
                pl.BlockSpec((1, _ROW_TILE, acc_w), out_map),
            ],
            scratch_shapes=[
                pltpu.VMEM((_ROW_TILE, acc_w), jnp.float32),   # bce partials
                pltpu.VMEM((_ROW_TILE, acc_w), jnp.float32),   # sigmoid * target
                pltpu.VMEM((_ROW_TILE, acc_w), jnp.float32),   # sigmoid + target
            ],
        ),
        compiler_params=pltpu.CompilerParams(
            dimension_semantics=("parallel", "parallel", "arbitrary"),
            vmem_limit_bytes=vmem_limit_bytes,
        ),
        cost_estimate=cost,
    )(pred2, true2)

    # Tiny final combine in plain JAX; exact division for the dice ratio.
    bce = jnp.sum(bce_p) / (n * f)
    inter_per = jnp.sum(inter_p, axis=(0, 2)).reshape(n, g).sum(axis=1)
    denom_per = jnp.sum(denom_p, axis=(0, 2)).reshape(n, g).sum(axis=1)
    dice_per = (2.0 * inter_per + _SMOOTH) / (denom_per + _SMOOTH)
    dice = 1.0 - jnp.sum(dice_per) / n
    return 0.5 * bce + 0.5 * dice


def _reference(y_pred, y_true):
    # Pure-JAX reference for sanity checking.
    x = jnp.reshape(y_pred, (y_pred.shape[0], -1)).astype(jnp.float32)
    y = jnp.reshape(y_true, (y_true.shape[0], -1)).astype(jnp.float32)
    bce = jnp.mean(jnp.maximum(x, 0.0) - x * y + jnp.log1p(jnp.exp(-jnp.abs(x))))
    s = jax.nn.sigmoid(x)
    dice_per = (2.0 * jnp.sum(s * y, axis=1) + _SMOOTH) / (
        jnp.sum(s, axis=1) + jnp.sum(y, axis=1) + _SMOOTH
    )
    dice = 1.0 - jnp.sum(dice_per) / x.shape[0]
    return 0.5 * bce + 0.5 * dice


if __name__ == "__main__":
    key = jax.random.PRNGKey(0)
    k1, k2, k3, k4 = jax.random.split(key, 4)

    # NCHW inputs: batch=2, channels=4, spatial=16x16  -> F = 1024 per sample.
    y_pred = jax.random.normal(k1, (2, 4, 16, 16), dtype=jnp.float32)
    y_true = (jax.random.uniform(k2, (2, 4, 16, 16)) > 0.5).astype(jnp.float32)
    ref = _reference(y_pred, y_true)

    # Default config (auto tile / split selection; exercises neutral padding).
    loss = logcosh_bd_loss(y_pred, y_true)
    jax.block_until_ready(loss)
    assert jnp.allclose(loss, ref, atol=2e-3, rtol=2e-3), (loss, ref)

    # Multi-step reduction grid (init / accumulate / finalize pipeline path).
    loss2 = logcosh_bd_loss(y_pred, y_true, tile_f=128, num_splits=1)
    jax.block_until_ready(loss2)
    assert jnp.allclose(loss2, ref, atol=2e-3, rtol=2e-3), (loss2, ref)

    # 2-way (v7x dual-TensorCore) split of the feature reduction.
    loss3 = logcosh_bd_loss(y_pred, y_true, tile_f=128, num_splits=2)
    jax.block_until_ready(loss3)
    assert jnp.allclose(loss3, ref, atol=2e-3, rtol=2e-3), (loss3, ref)

    # Ragged case: batch=3 (row grouping G=8, multiple row blocks), F=231
    # (not lane-aligned -> neutral padding path).
    yp = jax.random.normal(k3, (3, 3, 7, 11), dtype=jnp.float32)
    yt = (jax.random.uniform(k4, (3, 3, 7, 11)) > 0.5).astype(jnp.float32)
    loss4 = logcosh_bd_loss(yp, yt)
    jax.block_until_ready(loss4)
    ref4 = _reference(yp, yt)
    assert jnp.allclose(loss4, ref4, atol=2e-3, rtol=2e-3), (loss4, ref4)

    print("KERNEL_OK")
</pallas_src>

<mosaic_0001>
module attributes {stable_mosaic.version = 11 : i64} {
  func.func @_logcosh_bd_kernel(%arg0: i32, %arg1: i32, %arg2: i32, %arg3: memref<8x512xf32, #tpu.memory_space<vmem>>, %arg4: memref<8x512xf32, #tpu.memory_space<vmem>>, %arg5: memref<1x8x512xf32, #tpu.memory_space<vmem>>, %arg6: memref<1x8x512xf32, #tpu.memory_space<vmem>>, %arg7: memref<1x8x512xf32, #tpu.memory_space<vmem>>, %arg8: memref<8x512xf32, #tpu.memory_space<vmem>>, %arg9: memref<8x512xf32, #tpu.memory_space<vmem>>, %arg10: memref<8x512xf32, #tpu.memory_space<vmem>>) attributes {dimension_semantics = [#tpu.dimension_semantics<parallel>, #tpu.dimension_semantics<parallel>, #tpu.dimension_semantics<arbitrary>], iteration_bounds = array<i64: 1, 1, 1>, scalar_prefetch = 0 : i64, scratch_operands = 3 : i64, tpu.core_type = #tpu.core_type<tc>, window_params = [{transform_indices = @transform_0, window_bounds = array<i64: 8, 512>}, {transform_indices = @transform_1, window_bounds = array<i64: 8, 512>}, {transform_indices = @transform_2, window_bounds = array<i64: 1, 8, 512>}, {transform_indices = @transform_3, window_bounds = array<i64: 1, 8, 512>}, {transform_indices = @transform_4, window_bounds = array<i64: 1, 8, 512>}]} {
    %c0_i32 = arith.constant 0 : i32
    %0 = arith.cmpi eq, %arg2, %c0_i32 : i32
    %1 = arith.extui %0 : i1 to i32
    %c0_i32_0 = arith.constant 0 : i32
    %2 = arith.cmpi ne, %1, %c0_i32_0 : i32
    scf.if %2 {
      %cst_21 = arith.constant 0.000000e+00 : f32
      %36 = vector.broadcast %cst_21 : f32 to vector<8x512xf32>
      %c0_22 = arith.constant 0 : index
      %c0_23 = arith.constant 0 : index
      %37 = vector.load %arg8[%c0_22, %c0_23] : memref<8x512xf32, #tpu.memory_space<vmem>>, vector<8x512xf32>
      tpu.vector_store %arg8[%c0_22, %c0_23], %36 {strides = array<i32>} : memref<8x512xf32, #tpu.memory_space<vmem>>, vector<8x512xf32>,
      %cst_24 = arith.constant 0.000000e+00 : f32
      %38 = vector.broadcast %cst_24 : f32 to vector<8x512xf32>
      %c0_25 = arith.constant 0 : index
      %c0_26 = arith.constant 0 : index
      %39 = vector.load %arg9[%c0_25, %c0_26] : memref<8x512xf32, #tpu.memory_space<vmem>>, vector<8x512xf32>
      tpu.vector_store %arg9[%c0_25, %c0_26], %38 {strides = array<i32>} : memref<8x512xf32, #tpu.memory_space<vmem>>, vector<8x512xf32>,
      %cst_27 = arith.constant 0.000000e+00 : f32
      %40 = vector.broadcast %cst_27 : f32 to vector<8x512xf32>
      %c0_28 = arith.constant 0 : index
      %c0_29 = arith.constant 0 : index
      %41 = vector.load %arg10[%c0_28, %c0_29] : memref<8x512xf32, #tpu.memory_space<vmem>>, vector<8x512xf32>
      tpu.vector_store %arg10[%c0_28, %c0_29], %40 {strides = array<i32>} : memref<8x512xf32, #tpu.memory_space<vmem>>, vector<8x512xf32>,
    } else {
    }
    %c0 = arith.constant 0 : index
    %c0_1 = arith.constant 0 : index
    %3 = vector.load %arg3[%c0, %c0_1] : memref<8x512xf32, #tpu.memory_space<vmem>>, vector<8x512xf32>
    %c0_2 = arith.constant 0 : index
    %c0_3 = arith.constant 0 : index
    %4 = vector.load %arg4[%c0_2, %c0_3] : memref<8x512xf32, #tpu.memory_space<vmem>>, vector<8x512xf32>
    %5 = math.absf %3 : vector<8x512xf32>
    %cst = arith.constant 0.000000e+00 : f32
    %6 = vector.broadcast %cst : f32 to vector<8x512xf32>
    %7 = arith.subf %6, %5 : vector<8x512xf32>
    %8 = math.exp %7 : vector<8x512xf32>
    %cst_4 = arith.constant 1.000000e+00 : f32
    %9 = vector.broadcast %cst_4 : f32 to vector<8x512xf32>
    %10 = arith.addf %9, %8 : vector<8x512xf32>
    %11 = tpu.reciprocal %10 {approx = true} : vector<8x512xf32> -> vector<8x512xf32>
    %cst_5 = arith.constant 0.000000e+00 : f32
    %12 = vector.broadcast %cst_5 : f32 to vector<8x512xf32>
    %13 = arith.cmpf oge, %3, %12 : vector<8x512xf32>
    %14 = arith.mulf %8, %11 : vector<8x512xf32>
    %15 = arith.select %13, %11, %14 : vector<8x512xi1>, vector<8x512xf32>
    %cst_6 = arith.constant 0.000000e+00 : f32
    %16 = vector.broadcast %cst_6 : f32 to vector<8x512xf32>
    %17 = arith.maximumf %3, %16 : vector<8x512xf32>
    %18 = arith.mulf %3, %4 : vector<8x512xf32>
    %19 = arith.subf %17, %18 : vector<8x512xf32>
    %20 = math.log1p %8 : vector<8x512xf32>
    %21 = arith.addf %19, %20 : vector<8x512xf32>
    %22 = arith.mulf %15, %4 : vector<8x512xf32>
    %23 = arith.addf %15, %4 : vector<8x512xf32>
    %c0_7 = arith.constant 0 : index
    %c0_8 = arith.constant 0 : index
    %24 = vector.load %arg8[%c0_7, %c0_8] : memref<8x512xf32, #tpu.memory_space<vmem>>, vector<8x512xf32>
    %25 = arith.addf %24, %21 : vector<8x512xf32>
    %c0_9 = arith.constant 0 : index
    %c0_10 = arith.constant 0 : index
    %26 = vector.load %arg8[%c0_9, %c0_10] : memref<8x512xf32, #tpu.memory_space<vmem>>, vector<8x512xf32>
    tpu.vector_store %arg8[%c0_9, %c0_10], %25 {strides = array<i32>} : memref<8x512xf32, #tpu.memory_space<vmem>>, vector<8x512xf32>,
    %c0_11 = arith.constant 0 : index
    %c0_12 = arith.constant 0 : index
    %27 = vector.load %arg9[%c0_11, %c0_12] : memref<8x512xf32, #tpu.memory_space<vmem>>, vector<8x512xf32>
    %28 = arith.addf %27, %22 : vector<8x512xf32>
    %c0_13 = arith.constant 0 : index
    %c0_14 = arith.constant 0 : index
    %29 = vector.load %arg9[%c0_13, %c0_14] : memref<8x512xf32, #tpu.memory_space<vmem>>, vector<8x512xf32>
    tpu.vector_store %arg9[%c0_13, %c0_14], %28 {strides = array<i32>} : memref<8x512xf32, #tpu.memory_space<vmem>>, vector<8x512xf32>,
    %c0_15 = arith.constant 0 : index
    %c0_16 = arith.constant 0 : index
    %30 = vector.load %arg10[%c0_15, %c0_16] : memref<8x512xf32, #tpu.memory_space<vmem>>, vector<8x512xf32>
    %31 = arith.addf %30, %23 : vector<8x512xf32>
    %c0_17 = arith.constant 0 : index
    %c0_18 = arith.constant 0 : index
    %32 = vector.load %arg10[%c0_17, %c0_18] : memref<8x512xf32, #tpu.memory_space<vmem>>, vector<8x512xf32>
    tpu.vector_store %arg10[%c0_17, %c0_18], %31 {strides = array<i32>} : memref<8x512xf32, #tpu.memory_space<vmem>>, vector<8x512xf32>,
    %c0_i32_19 = arith.constant 0 : i32
    %33 = arith.cmpi eq, %arg2, %c0_i32_19 : i32
    %34 = arith.extui %33 : i1 to i32
    %c0_i32_20 = arith.constant 0 : i32
    %35 = arith.cmpi ne, %34, %c0_i32_20 : i32
    scf.if %35 {
      %c0_21 = arith.constant 0 : index
      %c0_22 = arith.constant 0 : index
      %36 = vector.load %arg8[%c0_21, %c0_22] : memref<8x512xf32, #tpu.memory_space<vmem>>, vector<8x512xf32>
      %c0_23 = arith.constant 0 : index
      %c0_24 = arith.constant 0 : index
      %c0_25 = arith.constant 0 : index
      %37 = vector.load %arg5[%c0_23, %c0_24, %c0_25] : memref<1x8x512xf32, #tpu.memory_space<vmem>>, vector<1x8x512xf32>
      %38 = vector.shape_cast %37 : vector<1x8x512xf32> to vector<8x512xf32>
      %39 = vector.shape_cast %36 : vector<8x512xf32> to vector<1x8x512xf32>
      tpu.vector_store %arg5[%c0_23, %c0_24, %c0_25], %39 {strides = array<i32>} : memref<1x8x512xf32, #tpu.memory_space<vmem>>, vector<1x8x512xf32>,
      %c0_26 = arith.constant 0 : index
      %c0_27 = arith.constant 0 : index
      %40 = vector.load %arg9[%c0_26, %c0_27] : memref<8x512xf32, #tpu.memory_space<vmem>>, vector<8x512xf32>
      %c0_28 = arith.constant 0 : index
      %c0_29 = arith.constant 0 : index
      %c0_30 = arith.constant 0 : index
      %41 = vector.load %arg6[%c0_28, %c0_29, %c0_30] : memref<1x8x512xf32, #tpu.memory_space<vmem>>, vector<1x8x512xf32>
      %42 = vector.shape_cast %41 : vector<1x8x512xf32> to vector<8x512xf32>
      %43 = vector.shape_cast %40 : vector<8x512xf32> to vector<1x8x512xf32>
      tpu.vector_store %arg6[%c0_28, %c0_29, %c0_30], %43 {strides = array<i32>} : memref<1x8x512xf32, #tpu.memory_space<vmem>>, vector<1x8x512xf32>,
      %c0_31 = arith.constant 0 : index
      %c0_32 = arith.constant 0 : index
      %44 = vector.load %arg10[%c0_31, %c0_32] : memref<8x512xf32, #tpu.memory_space<vmem>>, vector<8x512xf32>
      %c0_33 = arith.constant 0 : index
      %c0_34 = arith.constant 0 : index
      %c0_35 = arith.constant 0 : index
      %45 = vector.load %arg7[%c0_33, %c0_34, %c0_35] : memref<1x8x512xf32, #tpu.memory_space<vmem>>, vector<1x8x512xf32>
      %46 = vector.shape_cast %45 : vector<1x8x512xf32> to vector<8x512xf32>
      %47 = vector.shape_cast %44 : vector<8x512xf32> to vector<1x8x512xf32>
      tpu.vector_store %arg7[%c0_33, %c0_34, %c0_35], %47 {strides = array<i32>} : memref<1x8x512xf32, #tpu.memory_space<vmem>>, vector<1x8x512xf32>,
    } else {
    }
    return
  }
  func.func @transform_0(%arg0: i32, %arg1: i32, %arg2: i32) -> (i32, i32) {
    %c1_i32 = arith.constant 1 : i32
    %0 = arith.muli %arg0, %c1_i32 : i32
    %1 = arith.addi %0, %arg2 : i32
    %c0_i32 = arith.constant 0 : i32
    return %arg1, %1 : i32, i32
  }
  func.func @transform_1(%arg0: i32, %arg1: i32, %arg2: i32) -> (i32, i32) {
    %c1_i32 = arith.constant 1 : i32
    %0 = arith.muli %arg0, %c1_i32 : i32
    %1 = arith.addi %0, %arg2 : i32
    %c0_i32 = arith.constant 0 : i32
    return %arg1, %1 : i32, i32
  }
  func.func @transform_2(%arg0: i32, %arg1: i32, %arg2: i32) -> (i32, i32, i32) {
    %c0_i32 = arith.constant 0 : i32
    %c0_i32_0 = arith.constant 0 : i32
    return %arg0, %arg1, %c0_i32 : i32, i32, i32
  }
  func.func @transform_3(%arg0: i32, %arg1: i32, %arg2: i32) -> (i32, i32, i32) {
    %c0_i32 = arith.constant 0 : i32
    %c0_i32_0 = arith.constant 0 : i32
    return %arg0, %arg1, %c0_i32 : i32, i32, i32
  }
  func.func @transform_4(%arg0: i32, %arg1: i32, %arg2: i32) -> (i32, i32, i32) {
    %c0_i32 = arith.constant 0 : i32
    %c0_i32_0 = arith.constant 0 : i32
    return %arg0, %arg1, %c0_i32 : i32, i32, i32
  }
}

</mosaic_0001>

<llo_original>
// kernel: tpu_custom_call.1
$region0: #{tpu_custom_call.1}
  #allocation0 [shape = 'u32[]', space=smem, size = 0x4, offset = 0x4, fixed_abs, tag = 'smem constant byte address 0x4 - core index']
  #allocation1 [shape = 'u32[72,128]{1,0:T(1,128)}', space=vmem, size = 0x9000, scoped, tag = 'internal scratch']
  #allocation2 [shape = 'f32[8,512]{1,0:T(8,128)}', space=vmem, size = 0x4000, scoped, tag = 'scratch operand']
  #allocation3 [shape = 'f32[8,512]{1,0:T(8,128)}', space=vmem, size = 0x4000, scoped, tag = 'scratch operand']
  #allocation4 [shape = 'f32[8,512]{1,0:T(8,128)}', space=vmem, size = 0x4000, scoped, tag = 'scratch operand']
  %s0 = inlined_call_operand.hbm [shape: f32[8,512], index: 0, kind: input, shape index: {}]
  %s1 = inlined_call_operand.hbm [shape: f32[8,512], index: 1, kind: input, shape index: {}]
  %s2 = inlined_call_operand.hbm [shape: f32[1,8,512], index: 2, kind: output, shape index: {0}]
  %s3 = inlined_call_operand.hbm [shape: f32[1,8,512], index: 3, kind: output, shape index: {1}]
  %s4 = inlined_call_operand.hbm [shape: f32[1,8,512], index: 4, kind: output, shape index: {2}]
  %5 = xla_tuple %s2, %s3, %s4
  %s6 = sld [smem:[#allocation0]]
  $region50: #{tpu_custom_call.1} parent=0
    _
  %s8 = ssub.s32 1, %s6
  %s9 = scalar_select 0, %s8, %s6
  $region1: #{tpu_custom_call.1} parent=0
    #allocation5 [shape = 'u8[16384]{0}', space=vmem, size = 0x4000, scoped, tag = 'input window, operand 0, single buffered']
    #allocation6 [shape = 's32[1]{0}', space=sflag, size = 0x4, scoped, tag = 'scoped memory for tpu_custom_call.1']
    #allocation7 [shape = 's32[1]{0}', space=sflag, size = 0x4, scoped, tag = 'scoped memory for tpu_custom_call.1']
    #allocation8 [shape = 'u8[16384]{0}', space=vmem, size = 0x4000, scoped, tag = 'input window, operand 1, single buffered']
    #allocation9 [shape = 's32[1]{0}', space=sflag, size = 0x4, scoped, tag = 'scoped memory for tpu_custom_call.1']
    #allocation10 [shape = 'u8[16384]{0}', space=vmem, size = 0x4000, scoped, tag = 'output window, operand 0, single buffered']
    #allocation11 [shape = 'u8[16384]{0}', space=vmem, size = 0x4000, scoped, tag = 'output window, operand 1, single buffered']
    #allocation12 [shape = 's32[1]{0}', space=sflag, size = 0x4, scoped, tag = 'scoped memory for tpu_custom_call.1']
    #allocation13 [shape = 'u8[16384]{0}', space=vmem, size = 0x4000, scoped, tag = 'output window, operand 2, single buffered']
    %10 = vsyncpa [#allocation6], 0
    %11 = vsyncpa [#allocation9], 0
    %12 = vsyncpa [#allocation7], 0
    %13 = vsyncpa [#allocation12], 0
    // Predicated region
    $region2: #{tpu_custom_call.1} parent=1 // pred_check
      _
    $region3: #{tpu_custom_call.1} parent=1 // pred_check_branch
      %15 = sbr.rel (0) target = $region5
    $region4: #{tpu_custom_call.1} parent=1 // pred_region
      %s16 = sadd.s32 0, 0
      %s17 = smul.u32 4, %s16
      %19 = vsyncadd [#allocation6], 0
      %s20 = smul.addr %s17, 8
      %s21 = scalar_lea.hbm %s0, %s20
      %s23 = sshll.u32 %s21, 4
      %s24 = int_to_ptr.hbm [resolvable:$true] %s23
      %s25 = sshll.u32 [#allocation5], 4
      %s26 = int_to_ptr.vmem [resolvable:$true] %s25
      %28 = dma.hbm_to_vmem [thread:$0]  %s24, 512, %s26, [#allocation6]
    $region5: #{tpu_custom_call.1} parent=1 // pred_fallthru
      _
    // Predicated region
    $region6: #{tpu_custom_call.1} parent=1 // pred_check
      _
    $region7: #{tpu_custom_call.1} parent=1 // pred_check_branch
      %30 = sbr.rel (0) target = $region9
    $region8: #{tpu_custom_call.1} parent=1 // pred_region
      %s31 = sadd.s32 0, 0
      %s32 = smul.u32 4, %s31
      %34 = vsyncadd [#allocation9], 0
      %s35 = smul.addr %s32, 8
      %s36 = scalar_lea.hbm %s1, %s35
      %s38 = sshll.u32 %s36, 4
      %s39 = int_to_ptr.hbm [resolvable:$true] %s38
      %s40 = sshll.u32 [#allocation8], 4
      %s41 = int_to_ptr.vmem [resolvable:$true] %s40
      %43 = dma.hbm_to_vmem [thread:$0]  %s39, 512, %s41, [#allocation9]
    $region9: #{tpu_custom_call.1} parent=1 // pred_fallthru
      _
    // Predicated region
    $region10: #{tpu_custom_call.1} parent=1 // pred_check
      _
    $region11: #{tpu_custom_call.1} parent=1 // pred_check_branch
      %45 = sbr.rel (0) target = $region13
    $region12: #{tpu_custom_call.1} parent=1 // pred_region
      %47 = dma.done [#allocation6], 512
    $region13: #{tpu_custom_call.1} parent=1 // pred_fallthru
      _
    // Predicated region
    $region14: #{tpu_custom_call.1} parent=1 // pred_check
      _
    $region15: #{tpu_custom_call.1} parent=1 // pred_check_branch
      %49 = sbr.rel (0) target = $region17
    $region16: #{tpu_custom_call.1} parent=1 // pred_region
      %51 = dma.done [#allocation9], 512
    $region17: #{tpu_custom_call.1} parent=1 // pred_fallthru
      _
    %s52 = sadd.s32 0, 0
    %s53 = smul.u32 4, %s52
    %s54 = sadd.s32 0, 0
    %s55 = smul.u32 4, %s54
    %p56 = scmp.eq.s32.totalorder 0, 0
    // Predicated region
    $region18: #{tpu_custom_call.1} parent=1 // pred_check
      %p57 = pneg %p56
    $region19: #{tpu_custom_call.1} parent=1 // pred_check_branch
      %59 = sbr.rel (%p57) target = $region21
    $region20: #{tpu_custom_call.1} parent=1 // pred_region
      %60 = vst [vmem:[#allocation2] sm:$0xff] 0.0
      %61 = vst [vmem:[#allocation2 + $0x8] sm:$0xff] 0.0
      %62 = vst [vmem:[#allocation2 + $0x10] sm:$0xff] 0.0
      %63 = vst [vmem:[#allocation2 + $0x18] sm:$0xff] 0.0
      %64 = vst [vmem:[#allocation3] sm:$0xff] 0.0
      %65 = vst [vmem:[#allocation3 + $0x8] sm:$0xff] 0.0
      %66 = vst [vmem:[#allocation3 + $0x10] sm:$0xff] 0.0
      %67 = vst [vmem:[#allocation3 + $0x18] sm:$0xff] 0.0
      %68 = vst [vmem:[#allocation4] sm:$0xff] 0.0
      %69 = vst [vmem:[#allocation4 + $0x8] sm:$0xff] 0.0
      %70 = vst [vmem:[#allocation4 + $0x10] sm:$0xff] 0.0
      %71 = vst [vmem:[#allocation4 + $0x18] sm:$0xff] 0.0
    $region21: #{tpu_custom_call.1} parent=1 // pred_fallthru
      _
    %v72 = vld [vmem:[#allocation5] sm:$0xff]
    %v73 = vld [vmem:[#allocation5 + $0x8] sm:$0xff]
    %v74 = vld [vmem:[#allocation5 + $0x10] sm:$0xff]
    %v75 = vld [vmem:[#allocation5 + $0x18] sm:$0xff]
    %v76 = vld [vmem:[#allocation8] sm:$0xff]
    %v77 = vld [vmem:[#allocation8 + $0x8] sm:$0xff]
    %v78 = vld [vmem:[#allocation8 + $0x10] sm:$0xff]
    %v79 = vld [vmem:[#allocation8 + $0x18] sm:$0xff]
    %v80 = vand.u32 2147483647, %v72
    %v81 = vand.u32 2147483647, %v73
    %v82 = vand.u32 2147483647, %v74
    %v83 = vand.u32 2147483647, %v75
    %v84 = vsub.f32 0.0, %v80
    %v85 = vsub.f32 0.0, %v81
    %v86 = vsub.f32 0.0, %v82
    %v87 = vsub.f32 0.0, %v83
    %v88 = vmul.f32 %v84, 1.442695
    %v89 = vpow.pop %v88
    %v90 = vmul.f32 %v85, 1.442695
    %v91 = vpow.pop %v90
    %v92 = vmul.f32 %v86, 1.442695
    %v93 = vpow.pop %v92
    %v94 = vmul.f32 %v87, 1.442695
    %v95 = vpow.pop %v94
    %v96 = vadd.f32 %v89, 1.0
    %v97 = vadd.f32 %v91, 1.0
    %v98 = vadd.f32 %v93, 1.0
    %v99 = vadd.f32 %v95, 1.0
    %v100 = vrcp.pop %v96
    %v101 = vrcp.pop %v97
    %v102 = vrcp.pop %v98
    %v103 = vrcp.pop %v99
    %vm104 = vcmp.ge.f32.partialorder %v72, 0.0
    %vm105 = vcmp.ge.f32.partialorder %v73, 0.0
    %vm106 = vcmp.ge.f32.partialorder %v74, 0.0
    %vm107 = vcmp.ge.f32.partialorder %v75, 0.0
    %v108 = vmul.f32 %v89, %v100
    %v109 = vmul.f32 %v91, %v101
    %v110 = vmul.f32 %v93, %v102
    %v111 = vmul.f32 %v95, %v103
    %v112 = vsel %vm104, %v100, %v108
    %v113 = vsel %vm105, %v101, %v109
    %v114 = vsel %vm106, %v102, %v110
    %v115 = vsel %vm107, %v103, %v111
    %v116 = vmax.f32 %v72, 0.0
    %v117 = vmax.f32 %v73, 0.0
    %v118 = vmax.f32 %v74, 0.0
    %v119 = vmax.f32 %v75, 0.0
    %v120 = vmul.f32 %v72, %v76
    %v121 = vmul.f32 %v73, %v77
    %v122 = vmul.f32 %v74, %v78
    %v123 = vmul.f32 %v75, %v79
    %v124 = vsub.f32 %v116, %v120
    %v125 = vsub.f32 %v117, %v121
    %v126 = vsub.f32 %v118, %v122
    %v127 = vsub.f32 %v119, %v123
    %v128 = vadd.f32 %v89, 1.0
    %v129 = vlog2.pop %v128
    %v130 = vmul.f32 %v129, 0.6931472
    %v131 = vmul.f32 -0.5, %v89
    %v132 = vadd.f32 %v131, 1.0
    %v133 = vmul.f32 %v132, %v89
    %v134 = vand.u32 2147483647, %v89
    %vm135 = vcmp.lt.f32.partialorder %v134, 0.0004427343
    %v136 = vsel %vm135, %v133, %v130
    %v137 = vadd.f32 %v91, 1.0
    %v138 = vlog2.pop %v137
    %v139 = vmul.f32 %v138, 0.6931472
    %v140 = vmul.f32 -0.5, %v91
    %v141 = vadd.f32 %v140, 1.0
    %v142 = vmul.f32 %v141, %v91
    %v143 = vand.u32 2147483647, %v91
    %vm144 = vcmp.lt.f32.partialorder %v143, 0.0004427343
    %v145 = vsel %vm144, %v142, %v139
    %v146 = vadd.f32 %v93, 1.0
    %v147 = vlog2.pop %v146
    %v148 = vmul.f32 %v147, 0.6931472
    %v149 = vmul.f32 -0.5, %v93
    %v150 = vadd.f32 %v149, 1.0
    %v151 = vmul.f32 %v150, %v93
    %v152 = vand.u32 2147483647, %v93
    %vm153 = vcmp.lt.f32.partialorder %v152, 0.0004427343
    %v154 = vsel %vm153, %v151, %v148
    %v155 = vadd.f32 %v95, 1.0
    %v156 = vlog2.pop %v155
    %v157 = vmul.f32 %v156, 0.6931472
    %v158 = vmul.f32 -0.5, %v95
    %v159 = vadd.f32 %v158, 1.0
    %v160 = vmul.f32 %v159, %v95
    %v161 = vand.u32 2147483647, %v95
    %vm162 = vcmp.lt.f32.partialorder %v161, 0.0004427343
    %v163 = vsel %vm162, %v160, %v157
    %v164 = vadd.f32 %v124, %v136
    %v165 = vadd.f32 %v125, %v145
    %v166 = vadd.f32 %v126, %v154
    %v167 = vadd.f32 %v127, %v163
    %v168 = vmul.f32 %v112, %v76
    %v169 = vmul.f32 %v113, %v77
    %v170 = vmul.f32 %v114, %v78
    %v171 = vmul.f32 %v115, %v79
    %v172 = vadd.f32 %v112, %v76
    %v173 = vadd.f32 %v113, %v77
    %v174 = vadd.f32 %v114, %v78
    %v175 = vadd.f32 %v115, %v79
    %v176 = vld [vmem:[#allocation2] sm:$0xff]
    %v177 = vld [vmem:[#allocation2 + $0x8] sm:$0xff]
    %v178 = vld [vmem:[#allocation2 + $0x10] sm:$0xff]
    %v179 = vld [vmem:[#allocation2 + $0x18] sm:$0xff]
    %v180 = vadd.f32 %v176, %v164
    %v181 = vadd.f32 %v177, %v165
    %v182 = vadd.f32 %v178, %v166
    %v183 = vadd.f32 %v179, %v167
    %184 = vst [vmem:[#allocation2] sm:$0xff] %v180
    %185 = vst [vmem:[#allocation2 + $0x8] sm:$0xff] %v181
    %186 = vst [vmem:[#allocation2 + $0x10] sm:$0xff] %v182
    %187 = vst [vmem:[#allocation2 + $0x18] sm:$0xff] %v183
    %v188 = vld [vmem:[#allocation3] sm:$0xff]
    %v189 = vld [vmem:[#allocation3 + $0x8] sm:$0xff]
    %v190 = vld [vmem:[#allocation3 + $0x10] sm:$0xff]
    %v191 = vld [vmem:[#allocation3 + $0x18] sm:$0xff]
    %v192 = vadd.f32 %v188, %v168
    %v193 = vadd.f32 %v189, %v169
    %v194 = vadd.f32 %v190, %v170
    %v195 = vadd.f32 %v191, %v171
    %196 = vst [vmem:[#allocation3] sm:$0xff] %v192
    %197 = vst [vmem:[#allocation3 + $0x8] sm:$0xff] %v193
    %198 = vst [vmem:[#allocation3 + $0x10] sm:$0xff] %v194
    %199 = vst [vmem:[#allocation3 + $0x18] sm:$0xff] %v195
    %v200 = vld [vmem:[#allocation4] sm:$0xff]
    %v201 = vld [vmem:[#allocation4 + $0x8] sm:$0xff]
    %v202 = vld [vmem:[#allocation4 + $0x10] sm:$0xff]
    %v203 = vld [vmem:[#allocation4 + $0x18] sm:$0xff]
    %v204 = vadd.f32 %v200, %v172
    %v205 = vadd.f32 %v201, %v173
    %v206 = vadd.f32 %v202, %v174
    %v207 = vadd.f32 %v203, %v175
    %208 = vst [vmem:[#allocation4] sm:$0xff] %v204
    %209 = vst [vmem:[#allocation4 + $0x8] sm:$0xff] %v205
    %210 = vst [vmem:[#allocation4 + $0x10] sm:$0xff] %v206
    %211 = vst [vmem:[#allocation4 + $0x18] sm:$0xff] %v207
    // Predicated region
    $region22: #{tpu_custom_call.1} parent=1 // pred_check
      %p212 = pneg %p56
    $region23: #{tpu_custom_call.1} parent=1 // pred_check_branch
      %214 = sbr.rel (%p212) target = $region25
    $region24: #{tpu_custom_call.1} parent=1 // pred_region
      %v215 = vld [vmem:[#allocation2] sm:$0xff]
      %v216 = vld [vmem:[#allocation2 + $0x8] sm:$0xff]
      %v217 = vld [vmem:[#allocation2 + $0x10] sm:$0xff]
      %v218 = vld [vmem:[#allocation2 + $0x18] sm:$0xff]
      %219 = vst [vmem:[#allocation10] sm:$0xff] %v215
      %220 = vst [vmem:[#allocation10 + $0x8] sm:$0xff] %v216
      %221 = vst [vmem:[#allocation10 + $0x10] sm:$0xff] %v217
      %222 = vst [vmem:[#allocation10 + $0x18] sm:$0xff] %v218
      %v223 = vld [vmem:[#allocation3] sm:$0xff]
      %v224 = vld [vmem:[#allocation3 + $0x8] sm:$0xff]
      %v225 = vld [vmem:[#allocation3 + $0x10] sm:$0xff]
      %v226 = vld [vmem:[#allocation3 + $0x18] sm:$0xff]
      %227 = vst [vmem:[#allocation11] sm:$0xff] %v223
      %228 = vst [vmem:[#allocation11 + $0x8] sm:$0xff] %v224
      %229 = vst [vmem:[#allocation11 + $0x10] sm:$0xff] %v225
      %230 = vst [vmem:[#allocation11 + $0x18] sm:$0xff] %v226
      %v231 = vld [vmem:[#allocation4] sm:$0xff]
      %v232 = vld [vmem:[#allocation4 + $0x8] sm:$0xff]
      %v233 = vld [vmem:[#allocation4 + $0x10] sm:$0xff]
      %v234 = vld [vmem:[#allocation4 + $0x18] sm:$0xff]
      %235 = vst [vmem:[#allocation13] sm:$0xff] %v231
      %236 = vst [vmem:[#allocation13 + $0x8] sm:$0xff] %v232
      %237 = vst [vmem:[#allocation13 + $0x10] sm:$0xff] %v233
      %238 = vst [vmem:[#allocation13 + $0x18] sm:$0xff] %v234
    $region25: #{tpu_custom_call.1} parent=1 // pred_fallthru
      _
    // Predicated region
    $region26: #{tpu_custom_call.1} parent=1 // pred_check
      _
    $region27: #{tpu_custom_call.1} parent=1 // pred_check_branch
      %240 = sbr.rel (0) target = $region29
    $region28: #{tpu_custom_call.1} parent=1 // pred_region
      %242 = vsyncadd [#allocation7], 0
      %s244 = sshll.u32 [#allocation10], 4
      %s245 = int_to_ptr.vmem [resolvable:$true] %s244
      %s246 = sshll.u32 %s2, 4
      %s247 = int_to_ptr.hbm [resolvable:$true] %s246
      %249 = dma.vmem_to_hbm [thread:$0]  %s245, 512, %s247, [#allocation7]
    $region29: #{tpu_custom_call.1} parent=1 // pred_fallthru
      _
    // Predicated region
    $region30: #{tpu_custom_call.1} parent=1 // pred_check
      _
    $region31: #{tpu_custom_call.1} parent=1 // pred_check_branch
      %251 = sbr.rel (0) target = $region33
    $region32: #{tpu_custom_call.1} parent=1 // pred_region
      %253 = vsyncadd [#allocation12], 0
      %s255 = sshll.u32 [#allocation11], 4
      %s256 = int_to_ptr.vmem [resolvable:$true] %s255
      %s257 = sshll.u32 %s3, 4
      %s258 = int_to_ptr.hbm [resolvable:$true] %s257
      %260 = dma.vmem_to_hbm [thread:$0]  %s256, 512, %s258, [#allocation12]
    $region33: #{tpu_custom_call.1} parent=1 // pred_fallthru
      _
    // Predicated region
    $region34: #{tpu_custom_call.1} parent=1 // pred_check
      _
    $region35: #{tpu_custom_call.1} parent=1 // pred_check_branch
      %262 = sbr.rel (0) target = $region37
    $region36: #{tpu_custom_call.1} parent=1 // pred_region
      %264 = vsyncadd [#allocation12], 0
      %s266 = sshll.u32 [#allocation13], 4
      %s267 = int_to_ptr.vmem [resolvable:$true] %s266
      %s268 = sshll.u32 %s4, 4
      %s269 = int_to_ptr.hbm [resolvable:$true] %s268
      %271 = dma.vmem_to_hbm [thread:$0]  %s267, 512, %s269, [#allocation12]
    $region37: #{tpu_custom_call.1} parent=1 // pred_fallthru
      _
    // Predicated region
    $region38: #{tpu_custom_call.1} parent=1 // pred_check
      _
    $region39: #{tpu_custom_call.1} parent=1 // pred_check_branch
      %273 = sbr.rel (0) target = $region41
    $region40: #{tpu_custom_call.1} parent=1 // pred_region
      %275 = dma.done [#allocation7], 512
    $region41: #{tpu_custom_call.1} parent=1 // pred_fallthru
      _
    // Predicated region
    $region42: #{tpu_custom_call.1} parent=1 // pred_check
      _
    $region43: #{tpu_custom_call.1} parent=1 // pred_check_branch
      %277 = sbr.rel (0) target = $region45
    $region44: #{tpu_custom_call.1} parent=1 // pred_region
      %279 = dma.done [#allocation12], 512
    $region45: #{tpu_custom_call.1} parent=1 // pred_fallthru
      _
    // Predicated region
    $region46: #{tpu_custom_call.1} parent=1 // pred_check
      _
    $region47: #{tpu_custom_call.1} parent=1 // pred_check_branch
      %281 = sbr.rel (0) target = $region49
    $region48: #{tpu_custom_call.1} parent=1 // pred_region
      %283 = dma.done [#allocation12], 512
    $region49: #{tpu_custom_call.1} parent=1 // pred_fallthru
      _
    %284 = vsyncpa [#allocation6], 1
    %285 = vsyncpa [#allocation9], 1
    %286 = vsyncpa [#allocation7], 1
    %287 = vsyncpa [#allocation12], 1

</llo_original>
